<compile_context>
chip_gen: v7x
topology: tpu7x:2x2x1
jax: 0.10.0
libtpu: 0.0.40
codegen_flags: <defaults>
</compile_context>

<pallas_src>
import functools

import jax
import jax.numpy as jnp
from jax import lax
from jax.experimental import pallas as pl
from jax.experimental.pallas import tpu as pltpu


def _round_up(x, m):
    return ((x + m - 1) // m) * m


def _fused_mlp_kernel(*refs, n_layers):
    """Fused [Linear+ReLU]* -> Linear on one (TB, in_dim) batch tile.

    refs = (x, w1, b1, ..., wN, bN, out)
      hidden layer i : w (in_i, out_i) bf16,  b (1, out_i) f32
      final layer    : w (out_dim, prev) bf16 (PyTorch layout), b (out_dim, 1) f32
      out            : (out_dim, TB) f32   -- lane-dense along batch
    """
    x_ref = refs[0]
    o_ref = refs[-1]

    h = x_ref[...]                                     # (TB, in_dim) bf16
    for i in range(n_layers - 1):
        w_ref = refs[1 + 2 * i]
        b_ref = refs[2 + 2 * i]
        y = jnp.dot(h, w_ref[...], preferred_element_type=jnp.float32)
        y = jnp.maximum(y + b_ref[...], 0.0)           # bias + ReLU in f32
        h = y.astype(x_ref.dtype)                      # back to bf16 for the MXU

    # Final layer as NT matmul: (out_dim, prev) x (TB, prev)^T -> (out_dim, TB).
    # Produces the transposed output directly from the MXU, so the store is
    # lane-dense (last dim = TB) instead of a masked (TB, out_dim=1) store.
    w_ref = refs[1 + 2 * (n_layers - 1)]
    b_ref = refs[2 + 2 * (n_layers - 1)]
    y_t = lax.dot_general(w_ref[...], h, (((1,), (1,)), ((), ())),
                          preferred_element_type=jnp.float32)
    y_t = y_t + b_ref[...]                             # (out_dim, 1) broadcasts over TB
    o_ref[...] = y_t.astype(o_ref.dtype)


def _pick_tb(B, in_dim, out_dim, weight_bytes, vmem_budget=24 << 20):
    """Pick a batch tile: >=128 rows, <=512, sized against the smallest VMEM
    budget (v7x: 64 MiB physical / 32 MiB scoped default; v5e/v6e: 128 MiB)."""
    tb = min(512, _round_up(B, 128))

    def tile_bytes(t):
        # double-buffered bf16 x tile + f32 out tile + resident weights/biases
        return 2 * (t * in_dim * 2 + out_dim * t * 4) + weight_bytes

    while tb > 128 and tile_bytes(tb) > vmem_budget:
        tb //= 2
    return tb


def fused_mlp(x_flat, params):
    """x_flat: (B, in_dim) f32.
    params: [(w:(in,out), b:(1,out)), ..., (w_last:(out_dim,prev), b_last:(out_dim,1))]
    returns (B, out_dim) f32.
    """
    B, in_dim = x_flat.shape
    n_layers = len(params)
    out_dim = params[-1][0].shape[0]

    weight_bytes = sum(w.size * 2 + b.size * 4 for w, b in params)
    TB = _pick_tb(B, in_dim, out_dim, weight_bytes)
    B_pad = _round_up(B, TB)
    if B_pad != B:
        x_flat = jnp.pad(x_flat, ((0, B_pad - B), (0, 0)))

    # bf16 inputs / weights, f32 biases + f32 accumulation in-kernel.
    flat_args = [x_flat.astype(jnp.bfloat16)]
    in_specs = [pl.BlockSpec((TB, in_dim), lambda i: (i, 0))]
    for w, b in params:
        flat_args += [w.astype(jnp.bfloat16), b.astype(jnp.float32)]
        in_specs += [pl.BlockSpec(w.shape, lambda i: (0, 0)),    # VMEM-resident
                     pl.BlockSpec(b.shape, lambda i: (0, 0))]

    # Cost hint for XLA's scheduler.
    layer_dims = []
    prev = in_dim
    for i, (w, _) in enumerate(params):
        o = w.shape[1] if i < n_layers - 1 else w.shape[0]
        layer_dims.append((prev, o))
        prev = o
    flops = sum(2 * B_pad * fi * fo for fi, fo in layer_dims)
    bytes_accessed = (B_pad * in_dim * 2 + weight_bytes + B_pad * out_dim * 4)

    kernel = functools.partial(_fused_mlp_kernel, n_layers=n_layers)

    out_t = pl.pallas_call(
        kernel,
        out_shape=jax.ShapeDtypeStruct((out_dim, B_pad), jnp.float32),
        grid=(B_pad // TB,),
        in_specs=in_specs,
        out_specs=pl.BlockSpec((out_dim, TB), lambda i: (0, i)),
        compiler_params=pltpu.CompilerParams(
            dimension_semantics=("parallel",)),     # shards batch tiles across v7x's 2 TCs
        cost_estimate=pl.CostEstimate(flops=flops, transcendentals=0,
                                      bytes_accessed=bytes_accessed),
    )(*flat_args)

    return out_t[:, :B].T                             # (B, out_dim), tiny layout fixup


def init_params(key, input_dim, output_dim, hidden_dims):
    """PyTorch-style init U(-1/sqrt(fan_in), 1/sqrt(fan_in)).

    Hidden layers stored as (in, out) with (1, out) bias  -> kernel does x @ W + b.
    Final layer stored as (out, in) with (out, 1) bias    -> kernel does the NT matmul.
    Math is identical to PyTorch's y = x @ W_pt.T + b for every layer.
    """
    dims = [input_dim] + list(hidden_dims or []) + [output_dim]
    params = []
    for i in range(len(dims) - 1):
        fan_in, fan_out = dims[i], dims[i + 1]
        key, kw, kb = jax.random.split(key, 3)
        bound = 1.0 / (fan_in ** 0.5)
        last = (i == len(dims) - 2)
        w_shape = (fan_out, fan_in) if last else (fan_in, fan_out)
        b_shape = (fan_out, 1) if last else (1, fan_out)
        w = jax.random.uniform(kw, w_shape, jnp.float32, -bound, bound)
        b = jax.random.uniform(kb, b_shape, jnp.float32, -bound, bound)
        params.append((w, b))
    return params


@jax.jit
def linear_regression_forward(x, params):
    """Equivalent of LinearRegressionModel.forward: (B, features, seq_len) -> (B, output_dim)."""
    B = x.shape[0]
    x_flat = x.reshape(B, -1)                          # nn.Flatten (row-major, same as PyTorch)
    return fused_mlp(x_flat, params)


if __name__ == "__main__":
    # Small shapes consistent with the module: features * seq_len = input_dim
    B, features, seq_len = 8, 4, 8
    input_dim = features * seq_len                     # 32
    hidden_dims = [32, 16]
    output_dim = 1

    key = jax.random.PRNGKey(0)
    key, kx = jax.random.split(key)
    x = jax.random.normal(kx, (B, features, seq_len), jnp.float32)

    params = init_params(key, input_dim, output_dim, hidden_dims)

    out = linear_regression_forward(x, params)
    out = jax.block_until_ready(out)

    # Pure-JAX reference with the SAME bf16-input / f32-accumulate precision.
    ref = x.reshape(B, -1).astype(jnp.bfloat16)
    for i, (w, b) in enumerate(params):
        if i < len(params) - 1:
            ref = jnp.dot(ref, w.astype(jnp.bfloat16),
                          preferred_element_type=jnp.float32) + b
            ref = jnp.maximum(ref, 0.0).astype(jnp.bfloat16)
        else:
            ref = jnp.dot(ref, w.astype(jnp.bfloat16).T,
                          preferred_element_type=jnp.float32) + b.T

    assert out.shape == (B, output_dim), out.shape
    assert jnp.allclose(out, ref, atol=1e-4, rtol=1e-4), (out, ref)

    print("KERNEL_OK")
</pallas_src>

<mosaic_0001>
module attributes {stable_mosaic.version = 11 : i64} {
  func.func @_fused_mlp_kernel(%arg0: i32, %arg1: memref<128x32xbf16, #tpu.memory_space<vmem>>, %arg2: memref<32x32xbf16, #tpu.memory_space<vmem>>, %arg3: memref<1x32xf32, #tpu.memory_space<vmem>>, %arg4: memref<32x16xbf16, #tpu.memory_space<vmem>>, %arg5: memref<1x16xf32, #tpu.memory_space<vmem>>, %arg6: memref<1x16xbf16, #tpu.memory_space<vmem>>, %arg7: memref<1x1xf32, #tpu.memory_space<vmem>>, %arg8: memref<1x128xf32, #tpu.memory_space<vmem>>) attributes {dimension_semantics = [#tpu.dimension_semantics<parallel>], iteration_bounds = array<i64: 1>, scalar_prefetch = 0 : i64, scratch_operands = 0 : i64, tpu.core_type = #tpu.core_type<tc>, window_params = [{transform_indices = @transform_0, window_bounds = array<i64: 128, 32>}, {pipeline_mode = #tpu.pipeline_mode<synchronous>, transform_indices = @transform_1, window_bounds = array<i64: 32, 32>}, {pipeline_mode = #tpu.pipeline_mode<synchronous>, transform_indices = @transform_2, window_bounds = array<i64: 1, 32>}, {pipeline_mode = #tpu.pipeline_mode<synchronous>, transform_indices = @transform_3, window_bounds = array<i64: 32, 16>}, {pipeline_mode = #tpu.pipeline_mode<synchronous>, transform_indices = @transform_4, window_bounds = array<i64: 1, 16>}, {pipeline_mode = #tpu.pipeline_mode<synchronous>, transform_indices = @transform_5, window_bounds = array<i64: 1, 16>}, {pipeline_mode = #tpu.pipeline_mode<synchronous>, transform_indices = @transform_6, window_bounds = array<i64: 1, 1>}, {transform_indices = @transform_7, window_bounds = array<i64: 1, 128>}]} {
    %c0 = arith.constant 0 : index
    %c0_0 = arith.constant 0 : index
    %0 = vector.load %arg1[%c0, %c0_0] : memref<128x32xbf16, #tpu.memory_space<vmem>>, vector<128x32xbf16>
    %c0_1 = arith.constant 0 : index
    %c0_2 = arith.constant 0 : index
    %1 = vector.load %arg2[%c0_1, %c0_2] : memref<32x32xbf16, #tpu.memory_space<vmem>>, vector<32x32xbf16>
    %cst = arith.constant dense<0.000000e+00> : vector<128x32xf32>
    %2 = tpu.matmul %0, %1, %cst {dimension_numbers = #tpu.dot_dimension_numbers<[1], [0], [0], [1], [0, 0, 1, 1], [], []>} : vector<128x32xbf16>, vector<32x32xbf16>, vector<128x32xf32> -> vector<128x32xf32>
    %c0_3 = arith.constant 0 : index
    %c0_4 = arith.constant 0 : index
    %3 = vector.load %arg3[%c0_3, %c0_4] : memref<1x32xf32, #tpu.memory_space<vmem>>, vector<1x32xf32>
    %4 = vector.broadcast %3 : vector<1x32xf32> to vector<128x32xf32>
    %5 = arith.addf %2, %4 : vector<128x32xf32>
    %cst_5 = arith.constant 0.000000e+00 : f32
    %6 = vector.broadcast %cst_5 : f32 to vector<128x32xf32>
    %7 = arith.maximumf %5, %6 : vector<128x32xf32>
    %8 = arith.truncf %7 : vector<128x32xf32> to vector<128x32xbf16>
    %c0_6 = arith.constant 0 : index
    %c0_7 = arith.constant 0 : index
    %9 = vector.load %arg4[%c0_6, %c0_7] : memref<32x16xbf16, #tpu.memory_space<vmem>>, vector<32x16xbf16>
    %cst_8 = arith.constant dense<0.000000e+00> : vector<128x16xf32>
    %10 = tpu.matmul %8, %9, %cst_8 {dimension_numbers = #tpu.dot_dimension_numbers<[1], [0], [0], [1], [0, 0, 1, 1], [], []>} : vector<128x32xbf16>, vector<32x16xbf16>, vector<128x16xf32> -> vector<128x16xf32>
    %c0_9 = arith.constant 0 : index
    %c0_10 = arith.constant 0 : index
    %11 = vector.load %arg5[%c0_9, %c0_10] : memref<1x16xf32, #tpu.memory_space<vmem>>, vector<1x16xf32>
    %12 = vector.broadcast %11 : vector<1x16xf32> to vector<128x16xf32>
    %13 = arith.addf %10, %12 : vector<128x16xf32>
    %cst_11 = arith.constant 0.000000e+00 : f32
    %14 = vector.broadcast %cst_11 : f32 to vector<128x16xf32>
    %15 = arith.maximumf %13, %14 : vector<128x16xf32>
    %16 = arith.truncf %15 : vector<128x16xf32> to vector<128x16xbf16>
    %c0_12 = arith.constant 0 : index
    %c0_13 = arith.constant 0 : index
    %17 = vector.load %arg6[%c0_12, %c0_13] : memref<1x16xbf16, #tpu.memory_space<vmem>>, vector<1x16xbf16>
    %cst_14 = arith.constant dense<0.000000e+00> : vector<1x128xf32>
    %18 = tpu.matmul %17, %16, %cst_14 {dimension_numbers = #tpu.dot_dimension_numbers<[1], [1], [0], [0], [0, 0, 1, 0], [], []>} : vector<1x16xbf16>, vector<128x16xbf16>, vector<1x128xf32> -> vector<1x128xf32>
    %c0_15 = arith.constant 0 : index
    %c0_16 = arith.constant 0 : index
    %19 = vector.load %arg7[%c0_15, %c0_16] : memref<1x1xf32, #tpu.memory_space<vmem>>, vector<1x1xf32>
    %20 = vector.broadcast %19 : vector<1x1xf32> to vector<1x128xf32>
    %21 = arith.addf %18, %20 : vector<1x128xf32>
    %c0_17 = arith.constant 0 : index
    %c0_18 = arith.constant 0 : index
    %22 = vector.load %arg8[%c0_17, %c0_18] : memref<1x128xf32, #tpu.memory_space<vmem>>, vector<1x128xf32>
    tpu.vector_store %arg8[%c0_17, %c0_18], %21 {strides = array<i32>} : memref<1x128xf32, #tpu.memory_space<vmem>>, vector<1x128xf32>,
    return
  }
  func.func @transform_0(%arg0: i32) -> (i32, i32) {
    %c0_i32 = arith.constant 0 : i32
    %c0_i32_0 = arith.constant 0 : i32
    return %arg0, %c0_i32 : i32, i32
  }
  func.func @transform_1(%arg0: i32) -> (i32, i32) {
    %c0_i32 = arith.constant 0 : i32
    %c0_i32_0 = arith.constant 0 : i32
    %c0_i32_1 = arith.constant 0 : i32
    return %c0_i32, %c0_i32_0 : i32, i32
  }
  func.func @transform_2(%arg0: i32) -> (i32, i32) {
    %c0_i32 = arith.constant 0 : i32
    %c0_i32_0 = arith.constant 0 : i32
    %c0_i32_1 = arith.constant 0 : i32
    return %c0_i32, %c0_i32_0 : i32, i32
  }
  func.func @transform_3(%arg0: i32) -> (i32, i32) {
    %c0_i32 = arith.constant 0 : i32
    %c0_i32_0 = arith.constant 0 : i32
    %c0_i32_1 = arith.constant 0 : i32
    return %c0_i32, %c0_i32_0 : i32, i32
  }
  func.func @transform_4(%arg0: i32) -> (i32, i32) {
    %c0_i32 = arith.constant 0 : i32
    %c0_i32_0 = arith.constant 0 : i32
    %c0_i32_1 = arith.constant 0 : i32
    return %c0_i32, %c0_i32_0 : i32, i32
  }
  func.func @transform_5(%arg0: i32) -> (i32, i32) {
    %c0_i32 = arith.constant 0 : i32
    %c0_i32_0 = arith.constant 0 : i32
    %c0_i32_1 = arith.constant 0 : i32
    return %c0_i32, %c0_i32_0 : i32, i32
  }
  func.func @transform_6(%arg0: i32) -> (i32, i32) {
    %c0_i32 = arith.constant 0 : i32
    %c0_i32_0 = arith.constant 0 : i32
    %c0_i32_1 = arith.constant 0 : i32
    return %c0_i32, %c0_i32_0 : i32, i32
  }
  func.func @transform_7(%arg0: i32) -> (i32, i32) {
    %c0_i32 = arith.constant 0 : i32
    %c0_i32_0 = arith.constant 0 : i32
    return %c0_i32, %arg0 : i32, i32
  }
}

</mosaic_0001>

<llo_original>
// kernel: linear_regression_forward.1
$region0: #{linear_regression_forward.1}
  #allocation0 [shape = 'u32[]', space=smem, size = 0x4, offset = 0x4, fixed_abs, tag = 'smem constant byte address 0x4 - core index']
  #allocation1 [shape = 'u32[144,128]{1,0:T(1,128)}', space=vmem, size = 0x12000, scoped, tag = 'internal scratch']
  #allocation2 [shape = 'f32[1,1]{1,0:T(1,128)S(1)}', space=vmem, size = 0x200, scoped, tag = 'scoped memory for linear_regression_forward.1']
  %s0 = inlined_call_operand.vmem [shape: bf16[128,32], index: 0, kind: input, shape index: {}]
  %s1 = inlined_call_operand.vmem [shape: bf16[32,32], index: 1, kind: input, shape index: {}]
  %s2 = inlined_call_operand.vmem [shape: f32[1,32], index: 2, kind: input, shape index: {}]
  %s3 = inlined_call_operand.vmem [shape: bf16[32,16], index: 3, kind: input, shape index: {}]
  %s4 = inlined_call_operand.vmem [shape: f32[1,16], index: 4, kind: input, shape index: {}]
  %s5 = inlined_call_operand.vmem [shape: bf16[1,16], index: 5, kind: input, shape index: {}]
  %s6 = inlined_call_operand.<no memory space> [shape: f32[1,1], index: 6, kind: input, shape index: {}]
  %s7 = inlined_call_operand.vmem [shape: f32[1,128], index: 7, kind: output, shape index: {}]
  %s8 = sld [smem:[#allocation0]]
  $region38: #{linear_regression_forward.1} parent=0
    _
  %s10 = ssub.s32 1, %s8
  %s11 = scalar_select 0, %s10, %s8
  %v12 = vstv %s6
  %13 = vst [vmem:[#allocation2] sm:$0x1] %v12
  // Predicated region
  $region2: #{linear_regression_forward.1} parent=0 // pred_check
    _
  $region3: #{linear_regression_forward.1} parent=0 // pred_check_branch
    %15 = sbr.rel (0) target = $region5
  $region4: #{linear_regression_forward.1} parent=0 // pred_region
    _
  $region5: #{linear_regression_forward.1} parent=0 // pred_fallthru
    _
  // Predicated region
  $region6: #{linear_regression_forward.1} parent=0 // pred_check
    _
  $region7: #{linear_regression_forward.1} parent=0 // pred_check_branch
    %17 = sbr.rel (0) target = $region9
  $region8: #{linear_regression_forward.1} parent=0 // pred_region
    _
  $region9: #{linear_regression_forward.1} parent=0 // pred_fallthru
    _
  // Predicated region
  $region10: #{linear_regression_forward.1} parent=0 // pred_check
    _
  $region11: #{linear_regression_forward.1} parent=0 // pred_check_branch
    %19 = sbr.rel (0) target = $region13
  $region12: #{linear_regression_forward.1} parent=0 // pred_region
    _
  $region13: #{linear_regression_forward.1} parent=0 // pred_fallthru
    _
  // Predicated region
  $region14: #{linear_regression_forward.1} parent=0 // pred_check
    _
  $region15: #{linear_regression_forward.1} parent=0 // pred_check_branch
    %21 = sbr.rel (0) target = $region17
  $region16: #{linear_regression_forward.1} parent=0 // pred_region
    _
  $region17: #{linear_regression_forward.1} parent=0 // pred_fallthru
    _
  // Predicated region
  $region18: #{linear_regression_forward.1} parent=0 // pred_check
    _
  $region19: #{linear_regression_forward.1} parent=0 // pred_check_branch
    %23 = sbr.rel (0) target = $region21
  $region20: #{linear_regression_forward.1} parent=0 // pred_region
    _
  $region21: #{linear_regression_forward.1} parent=0 // pred_fallthru
    _
  // Predicated region
  $region22: #{linear_regression_forward.1} parent=0 // pred_check
    _
  $region23: #{linear_regression_forward.1} parent=0 // pred_check_branch
    %25 = sbr.rel (0) target = $region25
  $region24: #{linear_regression_forward.1} parent=0 // pred_region
    _
  $region25: #{linear_regression_forward.1} parent=0 // pred_fallthru
    _
  // Predicated region
  $region26: #{linear_regression_forward.1} parent=0 // pred_check
    _
  $region27: #{linear_regression_forward.1} parent=0 // pred_check_branch
    %27 = sbr.rel (0) target = $region29
  $region28: #{linear_regression_forward.1} parent=0 // pred_region
    _
  $region29: #{linear_regression_forward.1} parent=0 // pred_fallthru
    _
  %v29 = vld [vmem:[%s0] sm:$0xf]
  %v30 = vld [vmem:[%s0 + $0x4] sm:$0xf]
  %v31 = vld [vmem:[%s0 + $0x8] sm:$0xf]
  %v32 = vld [vmem:[%s0 + $0xc] sm:$0xf]
  %v33 = vld [vmem:[%s0 + $0x10] sm:$0xf]
  %v34 = vld [vmem:[%s0 + $0x14] sm:$0xf]
  %v35 = vld [vmem:[%s0 + $0x18] sm:$0xf]
  %v36 = vld [vmem:[%s0 + $0x1c] sm:$0xf]
  %v37 = vld [vmem:[%s0 + $0x20] sm:$0xf]
  %v38 = vld [vmem:[%s0 + $0x24] sm:$0xf]
  %v39 = vld [vmem:[%s0 + $0x28] sm:$0xf]
  %v40 = vld [vmem:[%s0 + $0x2c] sm:$0xf]
  %v41 = vld [vmem:[%s0 + $0x30] sm:$0xf]
  %v42 = vld [vmem:[%s0 + $0x34] sm:$0xf]
  %v43 = vld [vmem:[%s0 + $0x38] sm:$0xf]
  %v44 = vld [vmem:[%s0 + $0x3c] sm:$0xf]
  %v45 = vld [vmem:[%s1] sm:$0xf]
  %v46 = vld [vmem:[%s1 + $0x4] sm:$0xf]
  %v47 = vld [vmem:[%s1 + $0x8] sm:$0xf]
  %v48 = vld [vmem:[%s1 + $0xc] sm:$0xf]
  %v49 = vld [vmem:[%s2] sm:$0x1]
  %v51 = vlaneseq
  %v52 = vshrl.u32 %v51, 7
  %v53 = vsub.s32 0, %v52
  %v54 = vrot.slane %v49, %v53
  %v72 = vunpack.c.l.b16 %v29
  %v73 = vunpack.c.l.b16 %v30
  %v74 = vunpack.c.l.b16 %v31
  %v75 = vunpack.c.l.b16 %v32
  %v76 = vunpack.c.l.b16 %v33
  %v77 = vunpack.c.l.b16 %v34
  %v78 = vunpack.c.l.b16 %v35
  %v79 = vunpack.c.l.b16 %v36
  %v80 = vunpack.c.l.b16 %v37
  %v81 = vunpack.c.l.b16 %v38
  %v82 = vunpack.c.l.b16 %v39
  %v83 = vunpack.c.l.b16 %v40
  %v84 = vunpack.c.l.b16 %v41
  %v85 = vunpack.c.l.b16 %v42
  %v86 = vunpack.c.l.b16 %v43
  %v87 = vunpack.c.l.b16 %v44
  %v88 = vpack.c.b16 %v73, %v72
  %v89 = vpack.c.b16 %v75, %v74
  %v90 = vpack.c.b16 %v77, %v76
  %v91 = vpack.c.b16 %v79, %v78
  %v92 = vpack.c.b16 %v81, %v80
  %v93 = vpack.c.b16 %v83, %v82
  %v94 = vpack.c.b16 %v85, %v84
  %v95 = vpack.c.b16 %v87, %v86
  %v100 = vunpack.c.l.b16 %v45
  %v101 = vunpack.c.l.b16 %v46
  %v102 = vunpack.c.l.b16 %v47
  %v103 = vunpack.c.l.b16 %v48
  %v104 = vpack.c.b16 %v101, %v100
  %v105 = vpack.c.b16 %v103, %v102
  %vm108 = vcmask 261120
  %v110 = vsel %vm108, %v88, 0
  %v113 = vsel %vm108, %v89, 0
  %v116 = vsel %vm108, %v90, 0
  %v119 = vsel %vm108, %v91, 0
  %v122 = vsel %vm108, %v92, 0
  %v125 = vsel %vm108, %v93, 0
  %v128 = vsel %vm108, %v94, 0
  %v131 = vsel %vm108, %v95, 0
  %133 = vmatprep.subr.bf16.mxu0 0
  %134 = vmatpush1.bf16.msra.mxu0 %v104
  %135 = vmatprep.subr.bf16.mxu0 0
  %136 = vmatpush1.bf16.msra.mxu0 %v105
  %137 = vmatprep.subr.bf16.mxu0 0
  %138 = vmatpush1.bf16.msra.mxu0 0
  %139 = vmatprep.subr.bf16.mxu0 0
  %140 = vmatpush1.bf16.msra.mxu0 0
  %141 = vmatprep.subr.bf16.mxu0 0
  %142 = vmatpush1.bf16.msra.mxu0 0
  %143 = vmatprep.subr.bf16.mxu0 0
  %144 = vmatpush1.bf16.msra.mxu0 0
  %145 = vmatprep.subr.bf16.mxu0 0
  %146 = vmatpush1.bf16.msra.mxu0 0
  %147 = vmatprep.subr.bf16.mxu0 0
  %148 = vmatpush1.bf16.msra.mxu0 0
  %149 = vmatprep.subr.bf16.mxu0 0
  %150 = vmatpush1.bf16.msra.mxu0 0
  %151 = vmatprep.subr.bf16.mxu0 0
  %152 = vmatpush1.bf16.msra.mxu0 0
  %153 = vmatprep.subr.bf16.mxu0 0
  %154 = vmatpush1.bf16.msra.mxu0 0
  %155 = vmatprep.subr.bf16.mxu0 0
  %156 = vmatpush1.bf16.msra.mxu0 0
  %157 = vmatprep.subr.bf16.mxu0 0
  %158 = vmatpush1.bf16.msra.mxu0 0
  %159 = vmatprep.subr.bf16.mxu0 0
  %160 = vmatpush1.bf16.msra.mxu0 0
  %161 = vmatprep.subr.bf16.mxu0 0
  %162 = vmatpush1.bf16.msra.mxu0 0
  %163 = vmatprep.subr.bf16.mxu0 0
  %164 = vmatpush1.bf16.msra.mxu0 0
  %165 = vmatprep.mubr.bf16.mxu0 0
  %166 = vmatmul.mubr.bf16.gmra.mrb[0].mxu0 %v110
  %v167 = vpop.f32.mrb[0].mxu0
  %v168 = vadd.f32 %v54, %v167
  %v169 = vpop.f32.mrb[0].mxu0
  %v170 = vpop.f32.mrb[0].mxu0
  %v171 = vadd.f32 %v54, %v170
  %v172 = vpop.f32.mrb[0].mxu0
  %173 = vmatprep.mubr.bf16.mxu0 0
  %174 = vmatmul.mubr.bf16.gmra.mrb[0].mxu0 %v113
  %v175 = vpop.f32.mrb[0].mxu0
  %v176 = vadd.f32 %v54, %v175
  %v177 = vpop.f32.mrb[0].mxu0
  %v178 = vpop.f32.mrb[0].mxu0
  %v179 = vadd.f32 %v54, %v178
  %v180 = vpop.f32.mrb[0].mxu0
  %181 = vmatprep.mubr.bf16.mxu0 0
  %182 = vmatmul.mubr.bf16.gmra.mrb[0].mxu0 %v116
  %v183 = vpop.f32.mrb[0].mxu0
  %v184 = vadd.f32 %v54, %v183
  %v185 = vpop.f32.mrb[0].mxu0
  %v186 = vpop.f32.mrb[0].mxu0
  %v187 = vadd.f32 %v54, %v186
  %v188 = vpop.f32.mrb[0].mxu0
  %189 = vmatprep.mubr.bf16.mxu0 0
  %190 = vmatmul.mubr.bf16.gmra.mrb[0].mxu0 %v119
  %v191 = vpop.f32.mrb[0].mxu0
  %v192 = vadd.f32 %v54, %v191
  %v193 = vpop.f32.mrb[0].mxu0
  %v194 = vpop.f32.mrb[0].mxu0
  %v195 = vadd.f32 %v54, %v194
  %v196 = vpop.f32.mrb[0].mxu0
  %197 = vmatprep.mubr.bf16.mxu0 0
  %198 = vmatmul.mubr.bf16.gmra.mrb[0].mxu0 %v122
  %v199 = vpop.f32.mrb[0].mxu0
  %v200 = vadd.f32 %v54, %v199
  %v201 = vpop.f32.mrb[0].mxu0
  %v202 = vpop.f32.mrb[0].mxu0
  %v203 = vadd.f32 %v54, %v202
  %v204 = vpop.f32.mrb[0].mxu0
  %205 = vmatprep.mubr.bf16.mxu0 0
  %206 = vmatmul.mubr.bf16.gmra.mrb[0].mxu0 %v125
  %v207 = vpop.f32.mrb[0].mxu0
  %v208 = vadd.f32 %v54, %v207
  %v209 = vpop.f32.mrb[0].mxu0
  %v210 = vpop.f32.mrb[0].mxu0
  %v211 = vadd.f32 %v54, %v210
  %v212 = vpop.f32.mrb[0].mxu0
  %213 = vmatprep.mubr.bf16.mxu0 0
  %214 = vmatmul.mubr.bf16.gmra.mrb[0].mxu0 %v128
  %v215 = vpop.f32.mrb[0].mxu0
  %v216 = vadd.f32 %v54, %v215
  %v217 = vpop.f32.mrb[0].mxu0
  %v218 = vpop.f32.mrb[0].mxu0
  %v219 = vadd.f32 %v54, %v218
  %v220 = vpop.f32.mrb[0].mxu0
  %221 = vmatprep.mubr.bf16.mxu0 0
  %222 = vmatmul.mubr.bf16.gmra.mrb[0].mxu0 %v131
  %v223 = vpop.f32.mrb[0].mxu0
  %v224 = vadd.f32 %v54, %v223
  %v225 = vpop.f32.mrb[0].mxu0
  %v226 = vpop.f32.mrb[0].mxu0
  %v227 = vadd.f32 %v54, %v226
  %v228 = vpop.f32.mrb[0].mxu0
  %229 = vdwg.mxu0
  %v230 = vmax.f32 %v168, 0.0
  %v231 = vmax.f32 %v171, 0.0
  %v232 = vmax.f32 %v176, 0.0
  %v233 = vmax.f32 %v179, 0.0
  %v234 = vmax.f32 %v184, 0.0
  %v235 = vmax.f32 %v187, 0.0
  %v236 = vmax.f32 %v192, 0.0
  %v237 = vmax.f32 %v195, 0.0
  %v238 = vmax.f32 %v200, 0.0
  %v239 = vmax.f32 %v203, 0.0
  %v240 = vmax.f32 %v208, 0.0
  %v241 = vmax.f32 %v211, 0.0
  %v242 = vmax.f32 %v216, 0.0
  %v243 = vmax.f32 %v219, 0.0
  %v244 = vmax.f32 %v224, 0.0
  %v245 = vmax.f32 %v227, 0.0
  %v246 = vpack.c.bf16 %v231, %v230
  %v247 = vpack.c.bf16 %v233, %v232
  %v248 = vpack.c.bf16 %v235, %v234
  %v249 = vpack.c.bf16 %v237, %v236
  %v250 = vpack.c.bf16 %v239, %v238
  %v251 = vpack.c.bf16 %v241, %v240
  %v252 = vpack.c.bf16 %v243, %v242
  %v253 = vpack.c.bf16 %v245, %v244
  %v254 = vld [vmem:[%s3] sm:$0xf]
  %v255 = vld [vmem:[%s3 + $0x4] sm:$0xf]
  %v256 = vld [vmem:[%s3 + $0x8] sm:$0xf]
  %v257 = vld [vmem:[%s3 + $0xc] sm:$0xf]
  %v258 = vld [vmem:[%s4] sm:$0x1]
  %v260 = vlaneseq
  %v261 = vshrl.u32 %v260, 7
  %v262 = vsub.s32 0, %v261
  %v263 = vrot.slane %v258, %v262
  %v269 = vunpack.c.l.b16 %v254
  %v270 = vunpack.c.l.b16 %v255
  %v271 = vunpack.c.l.b16 %v256
  %v272 = vunpack.c.l.b16 %v257
  %v273 = vpack.c.b16 %v270, %v269
  %v274 = vpack.c.b16 %v272, %v271
  %v278 = vsel %vm108, %v246, 0
  %v281 = vsel %vm108, %v247, 0
  %v284 = vsel %vm108, %v248, 0
  %v287 = vsel %vm108, %v249, 0
  %v290 = vsel %vm108, %v250, 0
  %v293 = vsel %vm108, %v251, 0
  %v296 = vsel %vm108, %v252, 0
  %v299 = vsel %vm108, %v253, 0
  %301 = vmatprep.subr.bf16.mxu0 0
  %302 = vmatpush1.bf16.msra.mxu0 %v273
  %303 = vmatprep.subr.bf16.mxu0 0
  %304 = vmatpush1.bf16.msra.mxu0 %v274
  %305 = vmatprep.subr.bf16.mxu0 0
  %306 = vmatpush1.bf16.msra.mxu0 0
  %307 = vmatprep.subr.bf16.mxu0 0
  %308 = vmatpush1.bf16.msra.mxu0 0
  %309 = vmatprep.subr.bf16.mxu0 0
  %310 = vmatpush1.bf16.msra.mxu0 0
  %311 = vmatprep.subr.bf16.mxu0 0
  %312 = vmatpush1.bf16.msra.mxu0 0
  %313 = vmatprep.subr.bf16.mxu0 0
  %314 = vmatpush1.bf16.msra.mxu0 0
  %315 = vmatprep.subr.bf16.mxu0 0
  %316 = vmatpush1.bf16.msra.mxu0 0
  %317 = vmatprep.subr.bf16.mxu0 0
  %318 = vmatpush1.bf16.msra.mxu0 0
  %319 = vmatprep.subr.bf16.mxu0 0
  %320 = vmatpush1.bf16.msra.mxu0 0
  %321 = vmatprep.subr.bf16.mxu0 0
  %322 = vmatpush1.bf16.msra.mxu0 0
  %323 = vmatprep.subr.bf16.mxu0 0
  %324 = vmatpush1.bf16.msra.mxu0 0
  %325 = vmatprep.subr.bf16.mxu0 0
  %326 = vmatpush1.bf16.msra.mxu0 0
  %327 = vmatprep.subr.bf16.mxu0 0
  %328 = vmatpush1.bf16.msra.mxu0 0
  %329 = vmatprep.subr.bf16.mxu0 0
  %330 = vmatpush1.bf16.msra.mxu0 0
  %331 = vmatprep.subr.bf16.mxu0 0
  %332 = vmatpush1.bf16.msra.mxu0 0
  %333 = vmatprep.mubr.bf16.mxu0 0
  %334 = vmatmul.mubr.bf16.gmra.mrb[0].mxu0 %v278
  %v335 = vpop.f32.mrb[0].mxu0
  %v336 = vadd.f32 %v263, %v335
  %v337 = vpop.f32.mrb[0].mxu0
  %v338 = vpop.f32.mrb[0].mxu0
  %v339 = vadd.f32 %v263, %v338
  %v340 = vpop.f32.mrb[0].mxu0
  %341 = vmatprep.mubr.bf16.mxu0 0
  %342 = vmatmul.mubr.bf16.gmra.mrb[0].mxu0 %v281
  %v343 = vpop.f32.mrb[0].mxu0
  %v344 = vadd.f32 %v263, %v343
  %v345 = vpop.f32.mrb[0].mxu0
  %v346 = vpop.f32.mrb[0].mxu0
  %v347 = vadd.f32 %v263, %v346
  %v348 = vpop.f32.mrb[0].mxu0
  %349 = vmatprep.mubr.bf16.mxu0 0
  %350 = vmatmul.mubr.bf16.gmra.mrb[0].mxu0 %v284
  %v351 = vpop.f32.mrb[0].mxu0
  %v352 = vadd.f32 %v263, %v351
  %v353 = vpop.f32.mrb[0].mxu0
  %v354 = vpop.f32.mrb[0].mxu0
  %v355 = vadd.f32 %v263, %v354
  %v356 = vpop.f32.mrb[0].mxu0
  %357 = vmatprep.mubr.bf16.mxu0 0
  %358 = vmatmul.mubr.bf16.gmra.mrb[0].mxu0 %v287
  %v359 = vpop.f32.mrb[0].mxu0
  %v360 = vadd.f32 %v263, %v359
  %v361 = vpop.f32.mrb[0].mxu0
  %v362 = vpop.f32.mrb[0].mxu0
  %v363 = vadd.f32 %v263, %v362
  %v364 = vpop.f32.mrb[0].mxu0
  %365 = vmatprep.mubr.bf16.mxu0 0
  %366 = vmatmul.mubr.bf16.gmra.mrb[0].mxu0 %v290
  %v367 = vpop.f32.mrb[0].mxu0
  %v368 = vadd.f32 %v263, %v367
  %v369 = vpop.f32.mrb[0].mxu0
  %v370 = vpop.f32.mrb[0].mxu0
  %v371 = vadd.f32 %v263, %v370
  %v372 = vpop.f32.mrb[0].mxu0
  %373 = vmatprep.mubr.bf16.mxu0 0
  %374 = vmatmul.mubr.bf16.gmra.mrb[0].mxu0 %v293
  %v375 = vpop.f32.mrb[0].mxu0
  %v376 = vadd.f32 %v263, %v375
  %v377 = vpop.f32.mrb[0].mxu0
  %v378 = vpop.f32.mrb[0].mxu0
  %v379 = vadd.f32 %v263, %v378
  %v380 = vpop.f32.mrb[0].mxu0
  %381 = vmatprep.mubr.bf16.mxu0 0
  %382 = vmatmul.mubr.bf16.gmra.mrb[0].mxu0 %v296
  %v383 = vpop.f32.mrb[0].mxu0
  %v384 = vadd.f32 %v263, %v383
  %v385 = vpop.f32.mrb[0].mxu0
  %v386 = vpop.f32.mrb[0].mxu0
  %v387 = vadd.f32 %v263, %v386
  %v388 = vpop.f32.mrb[0].mxu0
  %389 = vmatprep.mubr.bf16.mxu0 0
  %390 = vmatmul.mubr.bf16.gmra.mrb[0].mxu0 %v299
  %v391 = vpop.f32.mrb[0].mxu0
  %v392 = vadd.f32 %v263, %v391
  %v393 = vpop.f32.mrb[0].mxu0
  %v394 = vpop.f32.mrb[0].mxu0
  %v395 = vadd.f32 %v263, %v394
  %v396 = vpop.f32.mrb[0].mxu0
  %397 = vdwg.mxu0
  %v398 = vmax.f32 %v336, 0.0
  %v399 = vmax.f32 %v339, 0.0
  %v400 = vmax.f32 %v344, 0.0
  %v401 = vmax.f32 %v347, 0.0
  %v402 = vmax.f32 %v352, 0.0
  %v403 = vmax.f32 %v355, 0.0
  %v404 = vmax.f32 %v360, 0.0
  %v405 = vmax.f32 %v363, 0.0
  %v406 = vmax.f32 %v368, 0.0
  %v407 = vmax.f32 %v371, 0.0
  %v408 = vmax.f32 %v376, 0.0
  %v409 = vmax.f32 %v379, 0.0
  %v410 = vmax.f32 %v384, 0.0
  %v411 = vmax.f32 %v387, 0.0
  %v412 = vmax.f32 %v392, 0.0
  %v413 = vmax.f32 %v395, 0.0
  %v414 = vpack.c.bf16 %v399, %v398
  %v415 = vpack.c.bf16 %v401, %v400
  %v416 = vpack.c.bf16 %v403, %v402
  %v417 = vpack.c.bf16 %v405, %v404
  %v418 = vpack.c.bf16 %v407, %v406
  %v419 = vpack.c.bf16 %v409, %v408
  %v420 = vpack.c.bf16 %v411, %v410
  %v421 = vpack.c.bf16 %v413, %v412
  %v422 = vld [vmem:[%s5] sm:$0x1]
  %v423 = vld [vmem:[#allocation2] sm:$0x1]
  %425 = vset.pattern.permute.xlu0 0
  %426 = vperm.xlu0 %425, %v423
  %v427 = vpop.permute.xlu0 %426
  %v429 = vlaneseq
  %v430 = vshrl.u32 %v429, 7
  %v431 = vsub.s32 0, %v430
  %v432 = vrot.slane %v427, %v431
  %vm433 = vcmask 130048
  %v435 = vsel %vm433, %v422, 0
  %v438 = vsel %vm433, %v414, 0
  %v441 = vsel %vm433, %v415, 0
  %v444 = vsel %vm433, %v416, 0
  %v447 = vsel %vm433, %v417, 0
  %v450 = vsel %vm433, %v418, 0
  %v453 = vsel %vm433, %v419, 0
  %v456 = vsel %vm433, %v420, 0
  %v459 = vsel %vm433, %v421, 0
  %461 = vmatprep.subr.bf16.mxu0 0
  %462 = vmatpush1.bf16.xpose.msra.mxu0 %v438
  %463 = vmatprep.subr.bf16.mxu0 0
  %464 = vmatpush1.bf16.xpose.msra.mxu0 %v441
  %465 = vmatprep.subr.bf16.mxu0 0
  %466 = vmatpush1.bf16.xpose.msra.mxu0 %v444
  %467 = vmatprep.subr.bf16.mxu0 0
  %468 = vmatpush1.bf16.xpose.msra.mxu0 %v447
  %469 = vmatprep.subr.bf16.mxu0 0
  %470 = vmatpush1.bf16.xpose.msra.mxu0 %v450
  %471 = vmatprep.subr.bf16.mxu0 0
  %472 = vmatpush1.bf16.xpose.msra.mxu0 %v453
  %473 = vmatprep.subr.bf16.mxu0 0
  %474 = vmatpush1.bf16.xpose.msra.mxu0 %v456
  %475 = vmatprep.subr.bf16.mxu0 0
  %476 = vmatpush1.bf16.xpose.msra.mxu0 %v459
  %477 = vmatprep.subr.bf16.mxu0 0
  %478 = vmatpush1.bf16.xpose.msra.mxu0 0
  %479 = vmatprep.subr.bf16.mxu0 0
  %480 = vmatpush1.bf16.xpose.msra.mxu0 0
  %481 = vmatprep.subr.bf16.mxu0 0
  %482 = vmatpush1.bf16.xpose.msra.mxu0 0
  %483 = vmatprep.subr.bf16.mxu0 0
  %484 = vmatpush1.bf16.xpose.msra.mxu0 0
  %485 = vmatprep.subr.bf16.mxu0 0
  %486 = vmatpush1.bf16.xpose.msra.mxu0 0
  %487 = vmatprep.subr.bf16.mxu0 0
  %488 = vmatpush1.bf16.xpose.msra.mxu0 0
  %489 = vmatprep.subr.bf16.mxu0 0
  %490 = vmatpush1.bf16.xpose.msra.mxu0 0
  %491 = vmatprep.subr.bf16.mxu0 0
  %492 = vmatpush1.bf16.xpose.msra.mxu0 0
  %493 = vmatprep.mubr.bf16.mxu0 0
  %494 = vmatmul.mubr.bf16.gmra.mrb[0].mxu0 %v435
  %v495 = vpop.f32.mrb[0].mxu0
  %v496 = vadd.f32 %v432, %v495
  %v497 = vpop.f32.mrb[0].mxu0
  %v498 = vpop.f32.mrb[0].mxu0
  %v499 = vpop.f32.mrb[0].mxu0
  %500 = vdwg.mxu0
  %501 = vst [vmem:[%s7] sm:$0x1] %v496
  // Predicated region
  $region30: #{linear_regression_forward.1} parent=0 // pred_check
    _
  $region31: #{linear_regression_forward.1} parent=0 // pred_check_branch
    %503 = sbr.rel (0) target = $region33
  $region32: #{linear_regression_forward.1} parent=0 // pred_region
    _
  $region33: #{linear_regression_forward.1} parent=0 // pred_fallthru
    _
  // Predicated region
  $region34: #{linear_regression_forward.1} parent=0 // pred_check
    _
  $region35: #{linear_regression_forward.1} parent=0 // pred_check_branch
    %505 = sbr.rel (0) target = $region37
  $region36: #{linear_regression_forward.1} parent=0 // pred_region
    _
  $region37: #{linear_regression_forward.1} parent=0 // pred_fallthru
    _

</llo_original>
